<compile_context>
chip_gen: v7x
topology: tpu7x:2x2x1
jax: 0.10.0
libtpu: 0.0.40
codegen_flags: <defaults>
</compile_context>

<pallas_src>
import jax
import jax.numpy as jnp
from jax.experimental import pallas as pl
from jax.experimental.pallas import tpu as pltpu


def _round_up(x, m):
    return (x + m - 1) // m * m


def _cdiv(a, b):
    return (a + b - 1) // b


def ffn_kernel(x_ref, w1_ref, b1_ref, w2_ref, b2_ref, w3_ref, b3_ref, o_ref):
    # x may arrive as f32 (aligned fast path) or bf16 (pre-padded path); the
    # cast is a no-op in the latter case and keeps the MXU on its bf16 path.
    x = x_ref[...].astype(jnp.bfloat16)
    # Layer 1: Linear + ReLU (bf16 x bf16 -> f32 accumulate)
    h1 = jnp.dot(x, w1_ref[...], preferred_element_type=jnp.float32)
    h1 = jnp.maximum(h1 + b1_ref[...], 0.0)
    # Layer 2: Linear + ReLU
    h2 = jnp.dot(h1.astype(jnp.bfloat16), w2_ref[...], preferred_element_type=jnp.float32)
    h2 = jnp.maximum(h2 + b2_ref[...], 0.0)
    # Layer 3: Linear + Tanh
    h3 = jnp.dot(h2.astype(jnp.bfloat16), w3_ref[...], preferred_element_type=jnp.float32)
    o_ref[...] = jnp.tanh(h3 + b3_ref[...]).astype(o_ref.dtype)


def prepare_ffn_params(w1, b1, w2, b2, w3, b3):
    """One-time parameter prep (hoisted out of the per-call path).

    Pads every feature dim to a lane-dense multiple of 128 (zero padding keeps
    the math exact; padded output cols are tanh(0)=0 and sliced away) and casts
    weights to bf16.  w_i are (in, out) [PyTorch (out, in) pre-transposed],
    b_i are (1, out).
    """
    in_size, hid1 = w1.shape
    hid2 = w2.shape[1]
    out_size = w3.shape[1]
    in_p = _round_up(in_size, 128)
    h1_p = _round_up(hid1, 128)
    h2_p = _round_up(hid2, 128)
    out_p = _round_up(out_size, 128)

    def pad2(a, rows, cols, dtype):
        return jnp.pad(a, ((0, rows - a.shape[0]), (0, cols - a.shape[1]))).astype(dtype)

    return dict(
        w1=pad2(w1, in_p, h1_p, jnp.bfloat16),
        b1=pad2(b1, 1, h1_p, jnp.float32),
        w2=pad2(w2, h1_p, h2_p, jnp.bfloat16),
        b2=pad2(b2, 1, h2_p, jnp.float32),
        w3=pad2(w3, h2_p, out_p, jnp.bfloat16),
        b3=pad2(b3, 1, out_p, jnp.float32),
        in_size=in_size,
        out_size=out_size,
    )


def ffn_embedding(x, params, *, tm=512, megacore_split_min_rows=256):
    """x: [B, input_size] f32; params: output of prepare_ffn_params.

    Returns [B, output_size] float32. tm=512 is a good v7x default; v5e/v6e
    (128 MiB VMEM) can use tm up to 1024 for very large batches.
    """
    B, in_size = x.shape
    assert in_size == params["in_size"], "x feature dim mismatch"
    w1p, b1p = params["w1"], params["b1"]
    w2p, b2p = params["w2"], params["b2"]
    w3p, b3p = params["w3"], params["b3"]
    in_p, h1_p = w1p.shape
    h2_p = w2p.shape[1]
    out_p = w3p.shape[1]
    out_size = params["out_size"]

    # Balanced batch tiling:
    #  * tiles are multiples of 16 rows (bf16 packs 16 sublanes per vreg),
    #  * split B into roughly equal tiles instead of rounding the whole batch
    #    up to a multiple of tm (avoids up to ~2x padding waste),
    #  * force >=2 grid steps for large single-tile batches so both v7x
    #    TensorCores get work under dimension_semantics=("parallel",).
    n_tiles = max(1, _cdiv(B, tm))
    if n_tiles == 1 and B >= 2 * megacore_split_min_rows:
        n_tiles = 2
    tm_eff = _round_up(_cdiv(B, n_tiles), 16)
    B_p = n_tiles * tm_eff

    # Aligned-x fast path: feed f32 x directly (cast to bf16 in-kernel) and
    # skip the separate pad+cast pass over x in HBM.
    if B_p == B and in_p == in_size:
        xp = x
    else:
        xp = jnp.pad(x, ((0, B_p - B), (0, in_p - in_size))).astype(jnp.bfloat16)
    x_bytes = xp.dtype.itemsize

    # Grid-invariant weight/bias blocks: constant index_map -> single buffer.
    def const_spec(shape):
        return pl.BlockSpec(shape, lambda i: (0, 0), pipeline_mode=pl.Buffered(1))

    # VMEM footprint: x tile (double-buffered) + weights/biases (single buffer)
    # + output tile (double-buffered) + f32 activations + bf16 activation copies.
    footprint = (
        2 * tm_eff * in_p * x_bytes
        + (in_p * h1_p + h1_p * h2_p + h2_p * out_p) * 2
        + (h1_p + h2_p + out_p) * 4
        + 2 * tm_eff * out_p * 4
        + tm_eff * (h1_p + h2_p) * (4 + 2)
    )
    # Request actual need + headroom; cap at 48 MiB so we never claim v7x's
    # entire 64 MiB physical VMEM (Mosaic scratch needs room too).
    vmem_limit = int(min(max(footprint * 3 // 2, 16 * 1024 * 1024), 48 * 1024 * 1024))
    vmem_limit = max(vmem_limit, footprint + (2 << 20))

    flops = 2 * B_p * (in_p * h1_p + h1_p * h2_p + h2_p * out_p)
    transcendentals = B_p * out_p  # tanh
    bytes_accessed = (
        xp.size * x_bytes
        + (w1p.size + w2p.size + w3p.size) * 2
        + (b1p.size + b2p.size + b3p.size) * 4
        + B_p * out_p * 4
    )

    out_padded = pl.pallas_call(
        ffn_kernel,
        out_shape=jax.ShapeDtypeStruct((B_p, out_p), jnp.float32),
        grid_spec=pltpu.PrefetchScalarGridSpec(
            num_scalar_prefetch=0,
            grid=(n_tiles,),
            in_specs=[
                pl.BlockSpec((tm_eff, in_p), lambda i: (i, 0)),  # x batch tile
                const_spec((in_p, h1_p)),
                const_spec((1, h1_p)),
                const_spec((h1_p, h2_p)),
                const_spec((1, h2_p)),
                const_spec((h2_p, out_p)),
                const_spec((1, out_p)),
            ],
            out_specs=pl.BlockSpec((tm_eff, out_p), lambda i: (i, 0)),
        ),
        compiler_params=pltpu.CompilerParams(
            dimension_semantics=("parallel",),
            vmem_limit_bytes=vmem_limit,
        ),
        cost_estimate=pl.CostEstimate(
            flops=int(flops),
            transcendentals=int(transcendentals),
            bytes_accessed=int(bytes_accessed),
        ),
    )(xp, w1p, b1p, w2p, b2p, w3p, b3p)

    # TODO(synk): if x is a true one-hot encoding, replace layer 1 with a
    # scalar-prefetch row gather of W1 (PrefetchScalarGridSpec with
    # num_scalar_prefetch=1 + pl.Element row index_map), eliminating the
    # B x in_p read and the first matmul entirely (>10x HBM/MXU savings).
    # TODO(synk): for vocabulary-sized input_size on v7x (64 MiB VMEM), add a
    # K-axis grid over in_p with an f32 VMEM accumulator instead of keeping
    # the whole W1 resident.
    return out_padded[:B, :out_size]


def init_linear_params(key, in_features, out_features):
    """Deterministic init mimicking PyTorch nn.Linear (uniform +/- 1/sqrt(in))."""
    kw, kb = jax.random.split(key)
    bound = 1.0 / jnp.sqrt(jnp.float32(in_features))
    # PyTorch stores (out, in); transpose to (in, out) for x @ W.
    w = jax.random.uniform(kw, (out_features, in_features), jnp.float32, -bound, bound).T
    b = jax.random.uniform(kb, (1, out_features), jnp.float32, -bound, bound)
    return w, b


def ffn_reference_mixed(x, w1, b1, w2, b2, w3, b3):
    """Pure-JAX reference mirroring the kernel's bf16-input / f32-accumulate math."""
    bf = jnp.bfloat16
    h = jnp.maximum(
        jnp.dot(x.astype(bf), w1.astype(bf), preferred_element_type=jnp.float32) + b1, 0.0)
    h = jnp.maximum(
        jnp.dot(h.astype(bf), w2.astype(bf), preferred_element_type=jnp.float32) + b2, 0.0)
    return jnp.tanh(
        jnp.dot(h.astype(bf), w3.astype(bf), preferred_element_type=jnp.float32) + b3)


def ffn_reference_f32(x, w1, b1, w2, b2, w3, b3):
    h = jnp.maximum(x @ w1 + b1, 0.0)
    h = jnp.maximum(h @ w2 + b2, 0.0)
    return jnp.tanh(h @ w3 + b3)


if __name__ == "__main__":
    # Small shapes consistent with the module (hidden_size=256, output_size=32,
    # input width NOT a multiple of 128 to exercise the padding path).
    batch = 16
    input_size = 300
    hidden_size = 256
    output_size = 32

    key = jax.random.PRNGKey(0)
    kx, k1, k2, k3 = jax.random.split(key, 4)

    x = jax.random.normal(kx, (batch, input_size), jnp.float32)
    w1, b1 = init_linear_params(k1, input_size, hidden_size)
    w2, b2 = init_linear_params(k2, hidden_size, hidden_size // 2)
    w3, b3 = init_linear_params(k3, hidden_size // 2, output_size)

    # One-time parameter prep (hoisted out of the per-call path).
    params = prepare_ffn_params(w1, b1, w2, b2, w3, b3)
    params = jax.block_until_ready(params)

    out = ffn_embedding(x, params)
    out = jax.block_until_ready(out)

    assert out.shape == (batch, output_size)

    # Tight check against a reference using the same mixed-precision recipe.
    ref_mixed = ffn_reference_mixed(x, w1, b1, w2, b2, w3, b3)
    assert jnp.allclose(out, ref_mixed, atol=1e-2, rtol=1e-2)

    # Loose check against the pure-f32 PyTorch-equivalent forward pass.
    ref_f32 = ffn_reference_f32(x, w1, b1, w2, b2, w3, b3)
    assert jnp.allclose(out, ref_f32, atol=5e-2, rtol=5e-2)

    print("KERNEL_OK")
</pallas_src>

<mosaic_0001>
module attributes {stable_mosaic.version = 11 : i64} {
  func.func @ffn_kernel(%arg0: i32, %arg1: memref<16x384xbf16, #tpu.memory_space<vmem>>, %arg2: memref<384x256xbf16, #tpu.memory_space<vmem>>, %arg3: memref<1x256xf32, #tpu.memory_space<vmem>>, %arg4: memref<256x128xbf16, #tpu.memory_space<vmem>>, %arg5: memref<1x128xf32, #tpu.memory_space<vmem>>, %arg6: memref<128x128xbf16, #tpu.memory_space<vmem>>, %arg7: memref<1x128xf32, #tpu.memory_space<vmem>>, %arg8: memref<16x128xf32, #tpu.memory_space<vmem>>) attributes {dimension_semantics = [#tpu.dimension_semantics<parallel>], iteration_bounds = array<i64: 1>, scalar_prefetch = 0 : i64, scratch_operands = 0 : i64, tpu.core_type = #tpu.core_type<tc>, window_params = [{transform_indices = @transform_0, window_bounds = array<i64: 16, 384>}, {pipeline_mode = #tpu.pipeline_mode<synchronous>, transform_indices = @transform_1, window_bounds = array<i64: 384, 256>}, {pipeline_mode = #tpu.pipeline_mode<synchronous>, transform_indices = @transform_2, window_bounds = array<i64: 1, 256>}, {pipeline_mode = #tpu.pipeline_mode<synchronous>, transform_indices = @transform_3, window_bounds = array<i64: 256, 128>}, {pipeline_mode = #tpu.pipeline_mode<synchronous>, transform_indices = @transform_4, window_bounds = array<i64: 1, 128>}, {pipeline_mode = #tpu.pipeline_mode<synchronous>, transform_indices = @transform_5, window_bounds = array<i64: 128, 128>}, {pipeline_mode = #tpu.pipeline_mode<synchronous>, transform_indices = @transform_6, window_bounds = array<i64: 1, 128>}, {transform_indices = @transform_7, window_bounds = array<i64: 16, 128>}]} {
    %c0 = arith.constant 0 : index
    %c0_0 = arith.constant 0 : index
    %0 = vector.load %arg1[%c0, %c0_0] : memref<16x384xbf16, #tpu.memory_space<vmem>>, vector<16x384xbf16>
    %c0_1 = arith.constant 0 : index
    %c0_2 = arith.constant 0 : index
    %1 = vector.load %arg2[%c0_1, %c0_2] : memref<384x256xbf16, #tpu.memory_space<vmem>>, vector<384x256xbf16>
    %cst = arith.constant dense<0.000000e+00> : vector<16x256xf32>
    %2 = tpu.matmul %0, %1, %cst {dimension_numbers = #tpu.dot_dimension_numbers<[1], [0], [0], [1], [0, 0, 1, 1], [], []>} : vector<16x384xbf16>, vector<384x256xbf16>, vector<16x256xf32> -> vector<16x256xf32>
    %c0_3 = arith.constant 0 : index
    %c0_4 = arith.constant 0 : index
    %3 = vector.load %arg3[%c0_3, %c0_4] : memref<1x256xf32, #tpu.memory_space<vmem>>, vector<1x256xf32>
    %4 = vector.broadcast %3 : vector<1x256xf32> to vector<16x256xf32>
    %5 = arith.addf %2, %4 : vector<16x256xf32>
    %cst_5 = arith.constant 0.000000e+00 : f32
    %6 = vector.broadcast %cst_5 : f32 to vector<16x256xf32>
    %7 = arith.maximumf %5, %6 : vector<16x256xf32>
    %8 = arith.truncf %7 : vector<16x256xf32> to vector<16x256xbf16>
    %c0_6 = arith.constant 0 : index
    %c0_7 = arith.constant 0 : index
    %9 = vector.load %arg4[%c0_6, %c0_7] : memref<256x128xbf16, #tpu.memory_space<vmem>>, vector<256x128xbf16>
    %cst_8 = arith.constant dense<0.000000e+00> : vector<16x128xf32>
    %10 = tpu.matmul %8, %9, %cst_8 {dimension_numbers = #tpu.dot_dimension_numbers<[1], [0], [0], [1], [0, 0, 1, 1], [], []>} : vector<16x256xbf16>, vector<256x128xbf16>, vector<16x128xf32> -> vector<16x128xf32>
    %c0_9 = arith.constant 0 : index
    %c0_10 = arith.constant 0 : index
    %11 = vector.load %arg5[%c0_9, %c0_10] : memref<1x128xf32, #tpu.memory_space<vmem>>, vector<1x128xf32>
    %12 = vector.broadcast %11 : vector<1x128xf32> to vector<16x128xf32>
    %13 = arith.addf %10, %12 : vector<16x128xf32>
    %cst_11 = arith.constant 0.000000e+00 : f32
    %14 = vector.broadcast %cst_11 : f32 to vector<16x128xf32>
    %15 = arith.maximumf %13, %14 : vector<16x128xf32>
    %16 = arith.truncf %15 : vector<16x128xf32> to vector<16x128xbf16>
    %c0_12 = arith.constant 0 : index
    %c0_13 = arith.constant 0 : index
    %17 = vector.load %arg6[%c0_12, %c0_13] : memref<128x128xbf16, #tpu.memory_space<vmem>>, vector<128x128xbf16>
    %cst_14 = arith.constant dense<0.000000e+00> : vector<16x128xf32>
    %18 = tpu.matmul %16, %17, %cst_14 {dimension_numbers = #tpu.dot_dimension_numbers<[1], [0], [0], [1], [0, 0, 1, 1], [], []>} : vector<16x128xbf16>, vector<128x128xbf16>, vector<16x128xf32> -> vector<16x128xf32>
    %c0_15 = arith.constant 0 : index
    %c0_16 = arith.constant 0 : index
    %19 = vector.load %arg7[%c0_15, %c0_16] : memref<1x128xf32, #tpu.memory_space<vmem>>, vector<1x128xf32>
    %20 = vector.broadcast %19 : vector<1x128xf32> to vector<16x128xf32>
    %21 = arith.addf %18, %20 : vector<16x128xf32>
    %22 = math.tanh %21 : vector<16x128xf32>
    %c0_17 = arith.constant 0 : index
    %c0_18 = arith.constant 0 : index
    %23 = vector.load %arg8[%c0_17, %c0_18] : memref<16x128xf32, #tpu.memory_space<vmem>>, vector<16x128xf32>
    tpu.vector_store %arg8[%c0_17, %c0_18], %22 {strides = array<i32>} : memref<16x128xf32, #tpu.memory_space<vmem>>, vector<16x128xf32>,
    return
  }
  func.func @transform_0(%arg0: i32) -> (i32, i32) {
    %c0_i32 = arith.constant 0 : i32
    %c0_i32_0 = arith.constant 0 : i32
    return %arg0, %c0_i32 : i32, i32
  }
  func.func @transform_1(%arg0: i32) -> (i32, i32) {
    %c0_i32 = arith.constant 0 : i32
    %c0_i32_0 = arith.constant 0 : i32
    %c0_i32_1 = arith.constant 0 : i32
    return %c0_i32, %c0_i32_0 : i32, i32
  }
  func.func @transform_2(%arg0: i32) -> (i32, i32) {
    %c0_i32 = arith.constant 0 : i32
    %c0_i32_0 = arith.constant 0 : i32
    %c0_i32_1 = arith.constant 0 : i32
    return %c0_i32, %c0_i32_0 : i32, i32
  }
  func.func @transform_3(%arg0: i32) -> (i32, i32) {
    %c0_i32 = arith.constant 0 : i32
    %c0_i32_0 = arith.constant 0 : i32
    %c0_i32_1 = arith.constant 0 : i32
    return %c0_i32, %c0_i32_0 : i32, i32
  }
  func.func @transform_4(%arg0: i32) -> (i32, i32) {
    %c0_i32 = arith.constant 0 : i32
    %c0_i32_0 = arith.constant 0 : i32
    %c0_i32_1 = arith.constant 0 : i32
    return %c0_i32, %c0_i32_0 : i32, i32
  }
  func.func @transform_5(%arg0: i32) -> (i32, i32) {
    %c0_i32 = arith.constant 0 : i32
    %c0_i32_0 = arith.constant 0 : i32
    %c0_i32_1 = arith.constant 0 : i32
    return %c0_i32, %c0_i32_0 : i32, i32
  }
  func.func @transform_6(%arg0: i32) -> (i32, i32) {
    %c0_i32 = arith.constant 0 : i32
    %c0_i32_0 = arith.constant 0 : i32
    %c0_i32_1 = arith.constant 0 : i32
    return %c0_i32, %c0_i32_0 : i32, i32
  }
  func.func @transform_7(%arg0: i32) -> (i32, i32) {
    %c0_i32 = arith.constant 0 : i32
    %c0_i32_0 = arith.constant 0 : i32
    return %arg0, %c0_i32 : i32, i32
  }
}

</mosaic_0001>

<llo_original>
// kernel: tpu_custom_call.1
$region0: #{tpu_custom_call.1}
  #allocation0 [shape = 'u32[]', space=smem, size = 0x4, offset = 0x4, fixed_abs, tag = 'smem constant byte address 0x4 - core index']
  #allocation1 [shape = 'u32[144,128]{1,0:T(1,128)}', space=vmem, size = 0x12000, scoped, tag = 'internal scratch']
  %s0 = inlined_call_operand.hbm [shape: bf16[16,384], index: 0, kind: input, shape index: {}]
  %s1 = inlined_call_operand.hbm [shape: bf16[384,256], index: 1, kind: input, shape index: {}]
  %s2 = inlined_call_operand.vmem [shape: f32[1,256], index: 2, kind: input, shape index: {}]
  %s3 = inlined_call_operand.hbm [shape: bf16[256,128], index: 3, kind: input, shape index: {}]
  %s4 = inlined_call_operand.vmem [shape: f32[1,128], index: 4, kind: input, shape index: {}]
  %s5 = inlined_call_operand.hbm [shape: bf16[128,128], index: 5, kind: input, shape index: {}]
  %s6 = inlined_call_operand.vmem [shape: f32[1,128], index: 6, kind: input, shape index: {}]
  %s7 = inlined_call_operand.hbm [shape: f32[16,128], index: 7, kind: output, shape index: {}]
  %s8 = sld [smem:[#allocation0]]
  $region54: #{tpu_custom_call.1} parent=0
    _
  %s10 = ssub.s32 1, %s8
  %s11 = scalar_select 0, %s10, %s8
  $region1: #{tpu_custom_call.1} parent=0
    #allocation2 [shape = 'u8[12288]{0}', space=vmem, size = 0x3000, scoped, tag = 'input window, operand 0, single buffered']
    #allocation3 [shape = 's32[1]{0}', space=sflag, size = 0x4, scoped, tag = 'scoped memory for tpu_custom_call.1']
    #allocation4 [shape = 's32[1]{0}', space=sflag, size = 0x4, scoped, tag = 'scoped memory for tpu_custom_call.1']
    #allocation5 [shape = 'u8[196608]{0}', space=vmem, size = 0x30000, scoped, tag = 'input window, operand 1, single buffered']
    #allocation6 [shape = 's32[1]{0}', space=sflag, size = 0x4, scoped, tag = 'scoped memory for tpu_custom_call.1']
    #allocation7 [shape = 'u8[65536]{0}', space=vmem, size = 0x10000, scoped, tag = 'input window, operand 3, single buffered']
    #allocation8 [shape = 'u8[32768]{0}', space=vmem, size = 0x8000, scoped, tag = 'input window, operand 5, single buffered']
    #allocation9 [shape = 's32[1]{0}', space=sflag, size = 0x4, scoped, tag = 'scoped memory for tpu_custom_call.1']
    #allocation10 [shape = 'u8[8192]{0}', space=vmem, size = 0x2000, scoped, tag = 'output window, operand 0, single buffered']
    %12 = vsyncpa [#allocation3], 0
    %13 = vsyncpa [#allocation6], 0
    %14 = vsyncpa [#allocation9], 0
    %15 = vsyncpa [#allocation4], 0
    // Predicated region
    $region2: #{tpu_custom_call.1} parent=1 // pred_check
      _
    $region3: #{tpu_custom_call.1} parent=1 // pred_check_branch
      %17 = sbr.rel (0) target = $region5
    $region4: #{tpu_custom_call.1} parent=1 // pred_region
      %s19 = ssub.s32 384, 384
      %20 = vsyncadd [#allocation3], %s19
      %s21 = sshll.u32 [#allocation2], 4
      %s22 = int_to_ptr.vmem [resolvable:$true] %s21
      %27 = dma.hbm_to_vmem [thread:$0]  %s0, 384, %s22, [#allocation3], 192, 192, 12
    $region5: #{tpu_custom_call.1} parent=1 // pred_fallthru
      _
    // Predicated region
    $region6: #{tpu_custom_call.1} parent=1 // pred_check
      _
    $region7: #{tpu_custom_call.1} parent=1 // pred_check_branch
      %29 = sbr.rel (0) target = $region9
    $region8: #{tpu_custom_call.1} parent=1 // pred_region
      %s31 = ssub.s32 6144, 6144
      %32 = vsyncadd [#allocation6], %s31
      %s33 = sshll.u32 [#allocation5], 4
      %s34 = int_to_ptr.vmem [resolvable:$true] %s33
      %39 = dma.hbm_to_vmem [thread:$0]  %s1, 6144, %s34, [#allocation6], 128, 128, 8
    $region9: #{tpu_custom_call.1} parent=1 // pred_fallthru
      _
    // Predicated region
    $region10: #{tpu_custom_call.1} parent=1 // pred_check
      _
    $region11: #{tpu_custom_call.1} parent=1 // pred_check_branch
      %41 = sbr.rel (0) target = $region13
    $region12: #{tpu_custom_call.1} parent=1 // pred_region
      _
    $region13: #{tpu_custom_call.1} parent=1 // pred_fallthru
      _
    // Predicated region
    $region14: #{tpu_custom_call.1} parent=1 // pred_check
      _
    $region15: #{tpu_custom_call.1} parent=1 // pred_check_branch
      %43 = sbr.rel (0) target = $region17
    $region16: #{tpu_custom_call.1} parent=1 // pred_region
      %s45 = ssub.s32 2048, 2048
      %46 = vsyncadd [#allocation6], %s45
      %s47 = sshll.u32 [#allocation7], 4
      %s48 = int_to_ptr.vmem [resolvable:$true] %s47
      %53 = dma.hbm_to_vmem [thread:$0]  %s3, 2048, %s48, [#allocation6], 64, 64, 4
    $region17: #{tpu_custom_call.1} parent=1 // pred_fallthru
      _
    // Predicated region
    $region18: #{tpu_custom_call.1} parent=1 // pred_check
      _
    $region19: #{tpu_custom_call.1} parent=1 // pred_check_branch
      %55 = sbr.rel (0) target = $region21
    $region20: #{tpu_custom_call.1} parent=1 // pred_region
      _
    $region21: #{tpu_custom_call.1} parent=1 // pred_fallthru
      _
    // Predicated region
    $region22: #{tpu_custom_call.1} parent=1 // pred_check
      _
    $region23: #{tpu_custom_call.1} parent=1 // pred_check_branch
      %57 = sbr.rel (0) target = $region25
    $region24: #{tpu_custom_call.1} parent=1 // pred_region
      %s59 = ssub.s32 1024, 1024
      %60 = vsyncadd [#allocation9], %s59
      %s61 = sshll.u32 [#allocation8], 4
      %s62 = int_to_ptr.vmem [resolvable:$true] %s61
      %67 = dma.hbm_to_vmem [thread:$0]  %s5, 1024, %s62, [#allocation9], 64, 64, 4
    $region25: #{tpu_custom_call.1} parent=1 // pred_fallthru
      _
    // Predicated region
    $region26: #{tpu_custom_call.1} parent=1 // pred_check
      _
    $region27: #{tpu_custom_call.1} parent=1 // pred_check_branch
      %69 = sbr.rel (0) target = $region29
    $region28: #{tpu_custom_call.1} parent=1 // pred_region
      _
    $region29: #{tpu_custom_call.1} parent=1 // pred_fallthru
      _
    // Predicated region
    $region30: #{tpu_custom_call.1} parent=1 // pred_check
      _
    $region31: #{tpu_custom_call.1} parent=1 // pred_check_branch
      %71 = sbr.rel (0) target = $region33
    $region32: #{tpu_custom_call.1} parent=1 // pred_region
      %72 = dma.done [#allocation3], 384
    $region33: #{tpu_custom_call.1} parent=1 // pred_fallthru
      _
    // Predicated region
    $region34: #{tpu_custom_call.1} parent=1 // pred_check
      _
    $region35: #{tpu_custom_call.1} parent=1 // pred_check_branch
      %74 = sbr.rel (0) target = $region37
    $region36: #{tpu_custom_call.1} parent=1 // pred_region
      %75 = dma.done [#allocation6], 6144
    $region37: #{tpu_custom_call.1} parent=1 // pred_fallthru
      _
    // Predicated region
    $region38: #{tpu_custom_call.1} parent=1 // pred_check
      _
    $region39: #{tpu_custom_call.1} parent=1 // pred_check_branch
      %77 = sbr.rel (0) target = $region41
    $region40: #{tpu_custom_call.1} parent=1 // pred_region
      %78 = dma.done [#allocation6], 2048
    $region41: #{tpu_custom_call.1} parent=1 // pred_fallthru
      _
    // Predicated region
    $region42: #{tpu_custom_call.1} parent=1 // pred_check
      _
    $region43: #{tpu_custom_call.1} parent=1 // pred_check_branch
      %80 = sbr.rel (0) target = $region45
    $region44: #{tpu_custom_call.1} parent=1 // pred_region
      %81 = dma.done [#allocation9], 1024
    $region45: #{tpu_custom_call.1} parent=1 // pred_fallthru
      _
    %v83 = vld [vmem:[#allocation2] sm:$0xff]
    %v84 = vld [vmem:[#allocation2 + $0x8] sm:$0xf]
    %v85 = vld [vmem:[#allocation2 + $0xc] sm:$0xff]
    %v86 = vld [vmem:[#allocation2 + $0x14] sm:$0xf]
    %v87 = vld [vmem:[#allocation5] sm:$0xff]
    %v88 = vld [vmem:[#allocation5 + $0x8] sm:$0xff]
    %v89 = vld [vmem:[#allocation5 + $0x10] sm:$0xff]
    %v90 = vld [vmem:[#allocation5 + $0x18] sm:$0xff]
    %v91 = vld [vmem:[#allocation5 + $0x20] sm:$0xff]
    %v92 = vld [vmem:[#allocation5 + $0x28] sm:$0xff]
    %v93 = vld [vmem:[#allocation5 + $0x30] sm:$0xff]
    %v94 = vld [vmem:[#allocation5 + $0x38] sm:$0xff]
    %v95 = vld [vmem:[#allocation5 + $0x40] sm:$0xff]
    %v96 = vld [vmem:[#allocation5 + $0x48] sm:$0xff]
    %v97 = vld [vmem:[#allocation5 + $0x50] sm:$0xff]
    %v98 = vld [vmem:[#allocation5 + $0x58] sm:$0xff]
    %v99 = vld [vmem:[#allocation5 + $0x60] sm:$0xff]
    %v100 = vld [vmem:[#allocation5 + $0x68] sm:$0xff]
    %v101 = vld [vmem:[#allocation5 + $0x70] sm:$0xff]
    %v102 = vld [vmem:[#allocation5 + $0x78] sm:$0xff]
    %v103 = vld [vmem:[#allocation5 + $0x80] sm:$0xff]
    %v104 = vld [vmem:[#allocation5 + $0x88] sm:$0xff]
    %v105 = vld [vmem:[#allocation5 + $0x90] sm:$0xff]
    %v106 = vld [vmem:[#allocation5 + $0x98] sm:$0xff]
    %v107 = vld [vmem:[#allocation5 + $0xa0] sm:$0xff]
    %v108 = vld [vmem:[#allocation5 + $0xa8] sm:$0xff]
    %v109 = vld [vmem:[#allocation5 + $0xb0] sm:$0xff]
    %v110 = vld [vmem:[#allocation5 + $0xb8] sm:$0xff]
    %v111 = vld [vmem:[#allocation5 + $0xc0] sm:$0xff]
    %v112 = vld [vmem:[#allocation5 + $0xc8] sm:$0xff]
    %v113 = vld [vmem:[#allocation5 + $0xd0] sm:$0xff]
    %v114 = vld [vmem:[#allocation5 + $0xd8] sm:$0xff]
    %v115 = vld [vmem:[#allocation5 + $0xe0] sm:$0xff]
    %v116 = vld [vmem:[#allocation5 + $0xe8] sm:$0xff]
    %v117 = vld [vmem:[#allocation5 + $0xf0] sm:$0xff]
    %v118 = vld [vmem:[#allocation5 + $0xf8] sm:$0xff]
    %v119 = vld [vmem:[#allocation5 + $0x100] sm:$0xff]
    %v120 = vld [vmem:[#allocation5 + $0x108] sm:$0xff]
    %v121 = vld [vmem:[#allocation5 + $0x110] sm:$0xff]
    %v122 = vld [vmem:[#allocation5 + $0x118] sm:$0xff]
    %v123 = vld [vmem:[#allocation5 + $0x120] sm:$0xff]
    %v124 = vld [vmem:[#allocation5 + $0x128] sm:$0xff]
    %v125 = vld [vmem:[#allocation5 + $0x130] sm:$0xff]
    %v126 = vld [vmem:[#allocation5 + $0x138] sm:$0xff]
    %v127 = vld [vmem:[#allocation5 + $0x140] sm:$0xff]
    %v128 = vld [vmem:[#allocation5 + $0x148] sm:$0xff]
    %v129 = vld [vmem:[#allocation5 + $0x150] sm:$0xff]
    %v130 = vld [vmem:[#allocation5 + $0x158] sm:$0xff]
    %v131 = vld [vmem:[#allocation5 + $0x160] sm:$0xff]
    %v132 = vld [vmem:[#allocation5 + $0x168] sm:$0xff]
    %v133 = vld [vmem:[#allocation5 + $0x170] sm:$0xff]
    %v134 = vld [vmem:[#allocation5 + $0x178] sm:$0xff]
    %v135 = vld [vmem:[%s2] sm:$0x3]
    %v137 = vlaneseq
    %v138 = vshrl.u32 %v137, 7
    %v139 = vsub.s32 0, %v138
    %v140 = vrot.slane %v135, %v139
    %v141 = vlaneseq
    %v142 = vshrl.u32 %v141, 7
    %v143 = vsub.s32 1, %v142
    %v144 = vrot.slane %v135, %v143
    %v151 = vunpack.c.l.b16 %v83
    %v152 = vunpack.c.h.b16 %v83
    %v153 = vunpack.c.l.b16 %v84
    %v154 = vunpack.c.l.b16 %v85
    %v155 = vunpack.c.h.b16 %v85
    %v156 = vunpack.c.l.b16 %v86
    %v157 = vpack.c.b16 %v154, %v151
    %v158 = vpack.c.b16 %v155, %v152
    %v159 = vpack.c.b16 %v156, %v153
    %v211 = vunpack.c.l.b16 %v87
    %v212 = vunpack.c.h.b16 %v87
    %v213 = vunpack.c.l.b16 %v88
    %v214 = vunpack.c.h.b16 %v88
    %v215 = vunpack.c.l.b16 %v89
    %v216 = vunpack.c.h.b16 %v89
    %v217 = vunpack.c.l.b16 %v90
    %v218 = vunpack.c.h.b16 %v90
    %v219 = vunpack.c.l.b16 %v91
    %v220 = vunpack.c.h.b16 %v91
    %v221 = vunpack.c.l.b16 %v92
    %v222 = vunpack.c.h.b16 %v92
    %v223 = vunpack.c.l.b16 %v93
    %v224 = vunpack.c.h.b16 %v93
    %v225 = vunpack.c.l.b16 %v94
    %v226 = vunpack.c.h.b16 %v94
    %v227 = vunpack.c.l.b16 %v95
    %v228 = vunpack.c.h.b16 %v95
    %v229 = vunpack.c.l.b16 %v96
    %v230 = vunpack.c.h.b16 %v96
    %v231 = vunpack.c.l.b16 %v97
    %v232 = vunpack.c.h.b16 %v97
    %v233 = vunpack.c.l.b16 %v98
    %v234 = vunpack.c.h.b16 %v98
    %v235 = vunpack.c.l.b16 %v99
    %v236 = vunpack.c.h.b16 %v99
    %v237 = vunpack.c.l.b16 %v100
    %v238 = vunpack.c.h.b16 %v100
    %v239 = vunpack.c.l.b16 %v101
    %v240 = vunpack.c.h.b16 %v101
    %v241 = vunpack.c.l.b16 %v102
    %v242 = vunpack.c.h.b16 %v102
    %v243 = vunpack.c.l.b16 %v103
    %v244 = vunpack.c.h.b16 %v103
    %v245 = vunpack.c.l.b16 %v104
    %v246 = vunpack.c.h.b16 %v104
    %v247 = vunpack.c.l.b16 %v105
    %v248 = vunpack.c.h.b16 %v105
    %v249 = vunpack.c.l.b16 %v106
    %v250 = vunpack.c.h.b16 %v106
    %v251 = vunpack.c.l.b16 %v107
    %v252 = vunpack.c.h.b16 %v107
    %v253 = vunpack.c.l.b16 %v108
    %v254 = vunpack.c.h.b16 %v108
    %v255 = vunpack.c.l.b16 %v109
    %v256 = vunpack.c.h.b16 %v109
    %v257 = vunpack.c.l.b16 %v110
    %v258 = vunpack.c.h.b16 %v110
    %v259 = vunpack.c.l.b16 %v111
    %v260 = vunpack.c.h.b16 %v111
    %v261 = vunpack.c.l.b16 %v112
    %v262 = vunpack.c.h.b16 %v112
    %v263 = vunpack.c.l.b16 %v113
    %v264 = vunpack.c.h.b16 %v113
    %v265 = vunpack.c.l.b16 %v114
    %v266 = vunpack.c.h.b16 %v114
    %v267 = vunpack.c.l.b16 %v115
    %v268 = vunpack.c.h.b16 %v115
    %v269 = vunpack.c.l.b16 %v116
    %v270 = vunpack.c.h.b16 %v116
    %v271 = vunpack.c.l.b16 %v117
    %v272 = vunpack.c.h.b16 %v117
    %v273 = vunpack.c.l.b16 %v118
    %v274 = vunpack.c.h.b16 %v118
    %v275 = vunpack.c.l.b16 %v119
    %v276 = vunpack.c.h.b16 %v119
    %v277 = vunpack.c.l.b16 %v120
    %v278 = vunpack.c.h.b16 %v120
    %v279 = vunpack.c.l.b16 %v121
    %v280 = vunpack.c.h.b16 %v121
    %v281 = vunpack.c.l.b16 %v122
    %v282 = vunpack.c.h.b16 %v122
    %v283 = vunpack.c.l.b16 %v123
    %v284 = vunpack.c.h.b16 %v123
    %v285 = vunpack.c.l.b16 %v124
    %v286 = vunpack.c.h.b16 %v124
    %v287 = vunpack.c.l.b16 %v125
    %v288 = vunpack.c.h.b16 %v125
    %v289 = vunpack.c.l.b16 %v126
    %v290 = vunpack.c.h.b16 %v126
    %v291 = vunpack.c.l.b16 %v127
    %v292 = vunpack.c.h.b16 %v127
    %v293 = vunpack.c.l.b16 %v128
    %v294 = vunpack.c.h.b16 %v128
    %v295 = vunpack.c.l.b16 %v129
    %v296 = vunpack.c.h.b16 %v129
    %v297 = vunpack.c.l.b16 %v130
    %v298 = vunpack.c.h.b16 %v130
    %v299 = vunpack.c.l.b16 %v131
    %v300 = vunpack.c.h.b16 %v131
    %v301 = vunpack.c.l.b16 %v132
    %v302 = vunpack.c.h.b16 %v132
    %v303 = vunpack.c.l.b16 %v133
    %v304 = vunpack.c.h.b16 %v133
    %v305 = vunpack.c.l.b16 %v134
    %v306 = vunpack.c.h.b16 %v134
    %v307 = vpack.c.b16 %v213, %v211
    %v308 = vpack.c.b16 %v214, %v212
    %v309 = vpack.c.b16 %v217, %v215
    %v310 = vpack.c.b16 %v218, %v216
    %v311 = vpack.c.b16 %v221, %v219
    %v312 = vpack.c.b16 %v222, %v220
    %v313 = vpack.c.b16 %v225, %v223
    %v314 = vpack.c.b16 %v226, %v224
    %v315 = vpack.c.b16 %v229, %v227
    %v316 = vpack.c.b16 %v230, %v228
    %v317 = vpack.c.b16 %v233, %v231
    %v318 = vpack.c.b16 %v234, %v232
    %v319 = vpack.c.b16 %v237, %v235
    %v320 = vpack.c.b16 %v238, %v236
    %v321 = vpack.c.b16 %v241, %v239
    %v322 = vpack.c.b16 %v242, %v240
    %v323 = vpack.c.b16 %v245, %v243
    %v324 = vpack.c.b16 %v246, %v244
    %v325 = vpack.c.b16 %v249, %v247
    %v326 = vpack.c.b16 %v250, %v248
    %v327 = vpack.c.b16 %v253, %v251
    %v328 = vpack.c.b16 %v254, %v252
    %v329 = vpack.c.b16 %v257, %v255
    %v330 = vpack.c.b16 %v258, %v256
    %v331 = vpack.c.b16 %v261, %v259
    %v332 = vpack.c.b16 %v262, %v260
    %v333 = vpack.c.b16 %v265, %v263
    %v334 = vpack.c.b16 %v266, %v264
    %v335 = vpack.c.b16 %v269, %v267
    %v336 = vpack.c.b16 %v270, %v268
    %v337 = vpack.c.b16 %v273, %v271
    %v338 = vpack.c.b16 %v274, %v272
    %v339 = vpack.c.b16 %v277, %v275
    %v340 = vpack.c.b16 %v278, %v276
    %v341 = vpack.c.b16 %v281, %v279
    %v342 = vpack.c.b16 %v282, %v280
    %v343 = vpack.c.b16 %v285, %v283
    %v344 = vpack.c.b16 %v286, %v284
    %v345 = vpack.c.b16 %v289, %v287
    %v346 = vpack.c.b16 %v290, %v288
    %v347 = vpack.c.b16 %v293, %v291
    %v348 = vpack.c.b16 %v294, %v292
    %v349 = vpack.c.b16 %v297, %v295
    %v350 = vpack.c.b16 %v298, %v296
    %v351 = vpack.c.b16 %v301, %v299
    %v352 = vpack.c.b16 %v302, %v300
    %v353 = vpack.c.b16 %v305, %v303
    %v354 = vpack.c.b16 %v306, %v304
    %403 = vmatprep.subr.bf16.mxu0 %v308
    %404 = vmatpush1.bf16.msra.mxu0 %v307
    %405 = vmatprep.subr.bf16.mxu0 %v310
    %406 = vmatpush1.bf16.msra.mxu0 %v309
    %407 = vmatprep.subr.bf16.mxu0 %v312
    %408 = vmatpush1.bf16.msra.mxu0 %v311
    %409 = vmatprep.subr.bf16.mxu0 %v314
    %410 = vmatpush1.bf16.msra.mxu0 %v313
    %411 = vmatprep.subr.bf16.mxu0 %v316
    %412 = vmatpush1.bf16.msra.mxu0 %v315
    %413 = vmatprep.subr.bf16.mxu0 %v318
    %414 = vmatpush1.bf16.msra.mxu0 %v317
    %415 = vmatprep.subr.bf16.mxu0 %v320
    %416 = vmatpush1.bf16.msra.mxu0 %v319
    %417 = vmatprep.subr.bf16.mxu0 %v322
    %418 = vmatpush1.bf16.msra.mxu0 %v321
    %419 = vmatprep.subr.bf16.mxu0 %v324
    %420 = vmatpush1.bf16.msra.mxu0 %v323
    %421 = vmatprep.subr.bf16.mxu0 %v326
    %422 = vmatpush1.bf16.msra.mxu0 %v325
    %423 = vmatprep.subr.bf16.mxu0 %v328
    %424 = vmatpush1.bf16.msra.mxu0 %v327
    %425 = vmatprep.subr.bf16.mxu0 %v330
    %426 = vmatpush1.bf16.msra.mxu0 %v329
    %427 = vmatprep.subr.bf16.mxu0 %v332
    %428 = vmatpush1.bf16.msra.mxu0 %v331
    %429 = vmatprep.subr.bf16.mxu0 %v334
    %430 = vmatpush1.bf16.msra.mxu0 %v333
    %431 = vmatprep.subr.bf16.mxu0 %v336
    %432 = vmatpush1.bf16.msra.mxu0 %v335
    %433 = vmatprep.subr.bf16.mxu0 %v338
    %434 = vmatpush1.bf16.msra.mxu0 %v337
    %435 = vmatprep.mubr.bf16.mxu0 %v158
    %436 = vmatmul.mubr.bf16.gmra.mrb[0].mxu0 %v157
    %v437 = vpop.f32.mrb[0].mxu0
    %v438 = vadd.f32 %v140, %v437
    %v439 = vpop.f32.mrb[0].mxu0
    %v440 = vadd.f32 %v144, %v439
    %v441 = vpop.f32.mrb[0].mxu0
    %v442 = vadd.f32 %v140, %v441
    %v443 = vpop.f32.mrb[0].mxu0
    %v444 = vadd.f32 %v144, %v443
    %445 = vdwg.mxu0
    %446 = vmatprep.subr.bf16.mxu0 %v340
    %447 = vmatpush1.bf16.msra.mxu0 %v339
    %448 = vmatprep.subr.bf16.mxu0 %v342
    %449 = vmatpush1.bf16.msra.mxu0 %v341
    %450 = vmatprep.subr.bf16.mxu0 %v344
    %451 = vmatpush1.bf16.msra.mxu0 %v343
    %452 = vmatprep.subr.bf16.mxu0 %v346
    %453 = vmatpush1.bf16.msra.mxu0 %v345
    %454 = vmatprep.subr.bf16.mxu0 %v348
    %455 = vmatpush1.bf16.msra.mxu0 %v347
    %456 = vmatprep.subr.bf16.mxu0 %v350
    %457 = vmatpush1.bf16.msra.mxu0 %v349
    %458 = vmatprep.subr.bf16.mxu0 %v352
    %459 = vmatpush1.bf16.msra.mxu0 %v351
    %460 = vmatprep.subr.bf16.mxu0 %v354
    %461 = vmatpush1.bf16.msra.mxu0 %v353
    %462 = vmatprep.subr.bf16.mxu0 0
    %463 = vmatpush1.bf16.msra.mxu0 0
    %464 = vmatprep.subr.bf16.mxu0 0
    %465 = vmatpush1.bf16.msra.mxu0 0
    %466 = vmatprep.subr.bf16.mxu0 0
    %467 = vmatpush1.bf16.msra.mxu0 0
    %468 = vmatprep.subr.bf16.mxu0 0
    %469 = vmatpush1.bf16.msra.mxu0 0
    %470 = vmatprep.subr.bf16.mxu0 0
    %471 = vmatpush1.bf16.msra.mxu0 0
    %472 = vmatprep.subr.bf16.mxu0 0
    %473 = vmatpush1.bf16.msra.mxu0 0
    %474 = vmatprep.subr.bf16.mxu0 0
    %475 = vmatpush1.bf16.msra.mxu0 0
    %476 = vmatprep.subr.bf16.mxu0 0
    %477 = vmatpush1.bf16.msra.mxu0 0
    %478 = vmatprep.mubr.bf16.mxu0 0
    %479 = vmatmul.mubr.bf16.gmra.mrb[0].mxu0 %v159
    %v480 = vpop.f32.mrb[0].mxu0
    %v481 = vadd.f32 %v438, %v480
    %v482 = vpop.f32.mrb[0].mxu0
    %v483 = vadd.f32 %v440, %v482
    %v484 = vpop.f32.mrb[0].mxu0
    %v485 = vadd.f32 %v442, %v484
    %v486 = vpop.f32.mrb[0].mxu0
    %v487 = vadd.f32 %v444, %v486
    %488 = vdwg.mxu0
    %v489 = vmax.f32 %v481, 0.0
    %v490 = vmax.f32 %v483, 0.0
    %v491 = vmax.f32 %v485, 0.0
    %v492 = vmax.f32 %v487, 0.0
    %v493 = vpack.c.bf16 %v491, %v489
    %v494 = vpack.c.bf16 %v492, %v490
    %v495 = vld [vmem:[#allocation7] sm:$0xf]
    %v496 = vld [vmem:[#allocation7 + $0x4] sm:$0xf]
    %v497 = vld [vmem:[#allocation7 + $0x8] sm:$0xf]
    %v498 = vld [vmem:[#allocation7 + $0xc] sm:$0xf]
    %v499 = vld [vmem:[#allocation7 + $0x10] sm:$0xf]
    %v500 = vld [vmem:[#allocation7 + $0x14] sm:$0xf]
    %v501 = vld [vmem:[#allocation7 + $0x18] sm:$0xf]
    %v502 = vld [vmem:[#allocation7 + $0x1c] sm:$0xf]
    %v503 = vld [vmem:[#allocation7 + $0x20] sm:$0xf]
    %v504 = vld [vmem:[#allocation7 + $0x24] sm:$0xf]
    %v505 = vld [vmem:[#allocation7 + $0x28] sm:$0xf]
    %v506 = vld [vmem:[#allocation7 + $0x2c] sm:$0xf]
    %v507 = vld [vmem:[#allocation7 + $0x30] sm:$0xf]
    %v508 = vld [vmem:[#allocation7 + $0x34] sm:$0xf]
    %v509 = vld [vmem:[#allocation7 + $0x38] sm:$0xf]
    %v510 = vld [vmem:[#allocation7 + $0x3c] sm:$0xf]
    %v511 = vld [vmem:[#allocation7 + $0x40] sm:$0xf]
    %v512 = vld [vmem:[#allocation7 + $0x44] sm:$0xf]
    %v513 = vld [vmem:[#allocation7 + $0x48] sm:$0xf]
    %v514 = vld [vmem:[#allocation7 + $0x4c] sm:$0xf]
    %v515 = vld [vmem:[#allocation7 + $0x50] sm:$0xf]
    %v516 = vld [vmem:[#allocation7 + $0x54] sm:$0xf]
    %v517 = vld [vmem:[#allocation7 + $0x58] sm:$0xf]
    %v518 = vld [vmem:[#allocation7 + $0x5c] sm:$0xf]
    %v519 = vld [vmem:[#allocation7 + $0x60] sm:$0xf]
    %v520 = vld [vmem:[#allocation7 + $0x64] sm:$0xf]
    %v521 = vld [vmem:[#allocation7 + $0x68] sm:$0xf]
    %v522 = vld [vmem:[#allocation7 + $0x6c] sm:$0xf]
    %v523 = vld [vmem:[#allocation7 + $0x70] sm:$0xf]
    %v524 = vld [vmem:[#allocation7 + $0x74] sm:$0xf]
    %v525 = vld [vmem:[#allocation7 + $0x78] sm:$0xf]
    %v526 = vld [vmem:[#allocation7 + $0x7c] sm:$0xf]
    %v527 = vld [vmem:[%s4] sm:$0x1]
    %v529 = vlaneseq
    %v530 = vshrl.u32 %v529, 7
    %v531 = vsub.s32 0, %v530
    %v532 = vrot.slane %v527, %v531
    %v566 = vunpack.c.l.b16 %v495
    %v567 = vunpack.c.l.b16 %v496
    %v568 = vunpack.c.l.b16 %v497
    %v569 = vunpack.c.l.b16 %v498
    %v570 = vunpack.c.l.b16 %v499
    %v571 = vunpack.c.l.b16 %v500
    %v572 = vunpack.c.l.b16 %v501
    %v573 = vunpack.c.l.b16 %v502
    %v574 = vunpack.c.l.b16 %v503
    %v575 = vunpack.c.l.b16 %v504
    %v576 = vunpack.c.l.b16 %v505
    %v577 = vunpack.c.l.b16 %v506
    %v578 = vunpack.c.l.b16 %v507
    %v579 = vunpack.c.l.b16 %v508
    %v580 = vunpack.c.l.b16 %v509
    %v581 = vunpack.c.l.b16 %v510
    %v582 = vunpack.c.l.b16 %v511
    %v583 = vunpack.c.l.b16 %v512
    %v584 = vunpack.c.l.b16 %v513
    %v585 = vunpack.c.l.b16 %v514
    %v586 = vunpack.c.l.b16 %v515
    %v587 = vunpack.c.l.b16 %v516
    %v588 = vunpack.c.l.b16 %v517
    %v589 = vunpack.c.l.b16 %v518
    %v590 = vunpack.c.l.b16 %v519
    %v591 = vunpack.c.l.b16 %v520
    %v592 = vunpack.c.l.b16 %v521
    %v593 = vunpack.c.l.b16 %v522
    %v594 = vunpack.c.l.b16 %v523
    %v595 = vunpack.c.l.b16 %v524
    %v596 = vunpack.c.l.b16 %v525
    %v597 = vunpack.c.l.b16 %v526
    %v598 = vpack.c.b16 %v567, %v566
    %v599 = vpack.c.b16 %v569, %v568
    %v600 = vpack.c.b16 %v571, %v570
    %v601 = vpack.c.b16 %v573, %v572
    %v602 = vpack.c.b16 %v575, %v574
    %v603 = vpack.c.b16 %v577, %v576
    %v604 = vpack.c.b16 %v579, %v578
    %v605 = vpack.c.b16 %v581, %v580
    %v606 = vpack.c.b16 %v583, %v582
    %v607 = vpack.c.b16 %v585, %v584
    %v608 = vpack.c.b16 %v587, %v586
    %v609 = vpack.c.b16 %v589, %v588
    %v610 = vpack.c.b16 %v591, %v590
    %v611 = vpack.c.b16 %v593, %v592
    %v612 = vpack.c.b16 %v595, %v594
    %v613 = vpack.c.b16 %v597, %v596
    %630 = vmatprep.subr.bf16.mxu0 0
    %631 = vmatpush1.bf16.msra.mxu0 %v598
    %632 = vmatprep.subr.bf16.mxu0 0
    %633 = vmatpush1.bf16.msra.mxu0 %v599
    %634 = vmatprep.subr.bf16.mxu0 0
    %635 = vmatpush1.bf16.msra.mxu0 %v600
    %636 = vmatprep.subr.bf16.mxu0 0
    %637 = vmatpush1.bf16.msra.mxu0 %v601
    %638 = vmatprep.subr.bf16.mxu0 0
    %639 = vmatpush1.bf16.msra.mxu0 %v602
    %640 = vmatprep.subr.bf16.mxu0 0
    %641 = vmatpush1.bf16.msra.mxu0 %v603
    %642 = vmatprep.subr.bf16.mxu0 0
    %643 = vmatpush1.bf16.msra.mxu0 %v604
    %644 = vmatprep.subr.bf16.mxu0 0
    %645 = vmatpush1.bf16.msra.mxu0 %v605
    %646 = vmatprep.subr.bf16.mxu0 0
    %647 = vmatpush1.bf16.msra.mxu0 %v606
    %648 = vmatprep.subr.bf16.mxu0 0
    %649 = vmatpush1.bf16.msra.mxu0 %v607
    %650 = vmatprep.subr.bf16.mxu0 0
    %651 = vmatpush1.bf16.msra.mxu0 %v608
    %652 = vmatprep.subr.bf16.mxu0 0
    %653 = vmatpush1.bf16.msra.mxu0 %v609
    %654 = vmatprep.subr.bf16.mxu0 0
    %655 = vmatpush1.bf16.msra.mxu0 %v610
    %656 = vmatprep.subr.bf16.mxu0 0
    %657 = vmatpush1.bf16.msra.mxu0 %v611
    %658 = vmatprep.subr.bf16.mxu0 0
    %659 = vmatpush1.bf16.msra.mxu0 %v612
    %660 = vmatprep.subr.bf16.mxu0 0
    %661 = vmatpush1.bf16.msra.mxu0 %v613
    %662 = vmatprep.mubr.bf16.mxu0 %v494
    %663 = vmatmul.mubr.bf16.gmra.mrb[0].mxu0 %v493
    %v664 = vpop.f32.mrb[0].mxu0
    %v665 = vadd.f32 %v532, %v664
    %v666 = vpop.f32.mrb[0].mxu0
    %v667 = vpop.f32.mrb[0].mxu0
    %v668 = vadd.f32 %v532, %v667
    %v669 = vpop.f32.mrb[0].mxu0
    %670 = vdwg.mxu0
    %v671 = vmax.f32 %v665, 0.0
    %v672 = vmax.f32 %v668, 0.0
    %v673 = vpack.c.bf16 %v672, %v671
    %v674 = vld [vmem:[#allocation8] sm:$0xf]
    %v675 = vld [vmem:[#allocation8 + $0x4] sm:$0xf]
    %v676 = vld [vmem:[#allocation8 + $0x8] sm:$0xf]
    %v677 = vld [vmem:[#allocation8 + $0xc] sm:$0xf]
    %v678 = vld [vmem:[#allocation8 + $0x10] sm:$0xf]
    %v679 = vld [vmem:[#allocation8 + $0x14] sm:$0xf]
    %v680 = vld [vmem:[#allocation8 + $0x18] sm:$0xf]
    %v681 = vld [vmem:[#allocation8 + $0x1c] sm:$0xf]
    %v682 = vld [vmem:[#allocation8 + $0x20] sm:$0xf]
    %v683 = vld [vmem:[#allocation8 + $0x24] sm:$0xf]
    %v684 = vld [vmem:[#allocation8 + $0x28] sm:$0xf]
    %v685 = vld [vmem:[#allocation8 + $0x2c] sm:$0xf]
    %v686 = vld [vmem:[#allocation8 + $0x30] sm:$0xf]
    %v687 = vld [vmem:[#allocation8 + $0x34] sm:$0xf]
    %v688 = vld [vmem:[#allocation8 + $0x38] sm:$0xf]
    %v689 = vld [vmem:[#allocation8 + $0x3c] sm:$0xf]
    %v690 = vld [vmem:[%s6] sm:$0x1]
    %v692 = vlaneseq
    %v693 = vshrl.u32 %v692, 7
    %v694 = vsub.s32 0, %v693
    %v695 = vrot.slane %v690, %v694
    %v713 = vunpack.c.l.b16 %v674
    %v714 = vunpack.c.l.b16 %v675
    %v715 = vunpack.c.l.b16 %v676
    %v716 = vunpack.c.l.b16 %v677
    %v717 = vunpack.c.l.b16 %v678
    %v718 = vunpack.c.l.b16 %v679
    %v719 = vunpack.c.l.b16 %v680
    %v720 = vunpack.c.l.b16 %v681
    %v721 = vunpack.c.l.b16 %v682
    %v722 = vunpack.c.l.b16 %v683
    %v723 = vunpack.c.l.b16 %v684
    %v724 = vunpack.c.l.b16 %v685
    %v725 = vunpack.c.l.b16 %v686
    %v726 = vunpack.c.l.b16 %v687
    %v727 = vunpack.c.l.b16 %v688
    %v728 = vunpack.c.l.b16 %v689
    %v729 = vpack.c.b16 %v714, %v713
    %v730 = vpack.c.b16 %v716, %v715
    %v731 = vpack.c.b16 %v718, %v717
    %v732 = vpack.c.b16 %v720, %v719
    %v733 = vpack.c.b16 %v722, %v721
    %v734 = vpack.c.b16 %v724, %v723
    %v735 = vpack.c.b16 %v726, %v725
    %v736 = vpack.c.b16 %v728, %v727
    %745 = vmatprep.subr.bf16.mxu0 0
    %746 = vmatpush1.bf16.msra.mxu0 %v729
    %747 = vmatprep.subr.bf16.mxu0 0
    %748 = vmatpush1.bf16.msra.mxu0 %v730
    %749 = vmatprep.subr.bf16.mxu0 0
    %750 = vmatpush1.bf16.msra.mxu0 %v731
    %751 = vmatprep.subr.bf16.mxu0 0
    %752 = vmatpush1.bf16.msra.mxu0 %v732
    %753 = vmatprep.subr.bf16.mxu0 0
    %754 = vmatpush1.bf16.msra.mxu0 %v733
    %755 = vmatprep.subr.bf16.mxu0 0
    %756 = vmatpush1.bf16.msra.mxu0 %v734
    %757 = vmatprep.subr.bf16.mxu0 0
    %758 = vmatpush1.bf16.msra.mxu0 %v735
    %759 = vmatprep.subr.bf16.mxu0 0
    %760 = vmatpush1.bf16.msra.mxu0 %v736
    %761 = vmatprep.subr.bf16.mxu0 0
    %762 = vmatpush1.bf16.msra.mxu0 0
    %763 = vmatprep.subr.bf16.mxu0 0
    %764 = vmatpush1.bf16.msra.mxu0 0
    %765 = vmatprep.subr.bf16.mxu0 0
    %766 = vmatpush1.bf16.msra.mxu0 0
    %767 = vmatprep.subr.bf16.mxu0 0
    %768 = vmatpush1.bf16.msra.mxu0 0
    %769 = vmatprep.subr.bf16.mxu0 0
    %770 = vmatpush1.bf16.msra.mxu0 0
    %771 = vmatprep.subr.bf16.mxu0 0
    %772 = vmatpush1.bf16.msra.mxu0 0
    %773 = vmatprep.subr.bf16.mxu0 0
    %774 = vmatpush1.bf16.msra.mxu0 0
    %775 = vmatprep.subr.bf16.mxu0 0
    %776 = vmatpush1.bf16.msra.mxu0 0
    %777 = vmatprep.mubr.bf16.mxu0 0
    %778 = vmatmul.mubr.bf16.gmra.mrb[0].mxu0 %v673
    %v779 = vpop.f32.mrb[0].mxu0
    %v780 = vadd.f32 %v695, %v779
    %v781 = vpop.f32.mrb[0].mxu0
    %v782 = vpop.f32.mrb[0].mxu0
    %v783 = vadd.f32 %v695, %v782
    %v784 = vpop.f32.mrb[0].mxu0
    %785 = vdwg.mxu0
    %v786 = vtanh.pop %v780
    %v787 = vtanh.pop %v783
    %788 = vst [vmem:[#allocation10] sm:$0xff] %v786
    %789 = vst [vmem:[#allocation10 + $0x8] sm:$0xff] %v787
    // Predicated region
    $region46: #{tpu_custom_call.1} parent=1 // pred_check
      _
    $region47: #{tpu_custom_call.1} parent=1 // pred_check_branch
      %791 = sbr.rel (0) target = $region49
    $region48: #{tpu_custom_call.1} parent=1 // pred_region
      %s793 = ssub.s32 256, 256
      %794 = vsyncadd [#allocation4], %s793
      %s795 = sshll.u32 [#allocation10], 4
      %s796 = int_to_ptr.vmem [resolvable:$true] %s795
      %801 = dma.vmem_to_hbm [thread:$0]  %s796, 256, %s7, [#allocation4], 128, 128, 8
    $region49: #{tpu_custom_call.1} parent=1 // pred_fallthru
      _
    // Predicated region
    $region50: #{tpu_custom_call.1} parent=1 // pred_check
      _
    $region51: #{tpu_custom_call.1} parent=1 // pred_check_branch
      %803 = sbr.rel (0) target = $region53
    $region52: #{tpu_custom_call.1} parent=1 // pred_region
      %804 = dma.done [#allocation4], 256
    $region53: #{tpu_custom_call.1} parent=1 // pred_fallthru
      _
    %805 = vsyncpa [#allocation3], 1
    %806 = vsyncpa [#allocation6], 1
    %807 = vsyncpa [#allocation9], 1
    %808 = vsyncpa [#allocation4], 1

</llo_original>
